<compile_context>
chip_gen: v5e
topology: v5e:2x2
jax: 0.10.0
libtpu: 0.0.40
codegen_flags: <defaults>
</compile_context>

<pallas_src>
import functools
import math

import numpy as np
import jax
import jax.numpy as jnp
from jax.experimental import pallas as pl
from jax.experimental.pallas import tpu as pltpu


def _round_up(n: int, m: int) -> int:
    return ((n + m - 1) // m) * m


def _pe_kernel(x_ref, tab_ref, out_ref):
    # x_ref:   (TB, 1)    f32   positions for this row tile
    # tab_ref: (2, Dpad)  f32   row 0 = frequencies (even: sin, odd: cos)
    #                           row 1 = phase bias  (0 on even, pi/2 on odd)
    # out_ref: (TB, Dpad) f32 | bf16
    # One FMA (VPU) + one sin (EUP) per element; cos(t) == sin(t + pi/2).
    freq = tab_ref[0:1, :]
    bias = tab_ref[1:2, :]
    out_ref[...] = jnp.sin(x_ref[...] * freq + bias).astype(out_ref.dtype)


@functools.lru_cache(maxsize=None)
def _build_table(dim_embedding: int, max_period: int, d_pad: int) -> np.ndarray:
    """Host-side (numpy) lane table, matching the module's __init__."""
    d = dim_embedding + int(dim_embedding % 2 == 1)
    sin_pos = np.arange(0, d, 2, dtype=np.float32) / np.float32(d)
    cos_pos = np.arange(1, d, 2, dtype=np.float32) / np.float32(d)
    log_mp = np.float32(math.log(float(max_period)))
    tab = np.zeros((2, d_pad), np.float32)
    tab[0, 0:d:2] = np.exp(-log_mp * sin_pos)
    tab[0, 1:d:2] = np.exp(-log_mp * cos_pos)
    tab[1, 1:d:2] = np.float32(math.pi / 2.0)      # cos(t) = sin(t + pi/2)
    # padded lanes: freq = 0, bias = 0 -> sin(0) = 0, sliced away in wrapper.
    return tab


def _choose_tb(b: int, d_pad: int, out_itemsize: int, row_align: int) -> int:
    """Row-tile size: VMEM-safe, step-overhead amortized, megacore friendly."""
    bytes_per_row = d_pad * out_itemsize
    # (a) VMEM cap: keep the double-buffered output tile <= ~12 MiB total
    #     (fits v5e's 16 MiB default scoped VMEM; ample headroom on v7x 64 MiB).
    max_rows_vmem = max(row_align, (6 * 1024 * 1024) // bytes_per_row)
    # (b) amortize the ~0.35 us per-grid-step overhead: >= ~1 MiB out per step.
    target_rows = max(256, (1 << 20) // bytes_per_row)
    tb = min(max_rows_vmem, target_rows)
    # (c) keep >= 2 grid steps when the batch allows it so the "parallel" axis
    #     shards across v7x's two TensorCores (no effect on v5e/v6e).
    if b > 2 * row_align:
        half = -(-b // 2)
        tb = min(tb, _round_up(half, row_align))
    # never exceed the (row-aligned) batch itself.
    tb = min(tb, _round_up(b, row_align))
    tb = (tb // row_align) * row_align
    return max(row_align, tb)


def positional_encoding(x, dim_embedding: int, max_period: int = 10000,
                        *, out_dtype=jnp.float32):
    """Pallas equivalent of PositionalEncoding.forward.

    Accepts x of shape (B,) or (B, 1); returns (B, D) in `out_dtype`, where
    D = dim_embedding rounded up to even (same as the PyTorch module).
    """
    if x.ndim not in (1, 2):
        raise ValueError(f"Input tensor must be 1D or 2D, got {x.ndim}D")
    if x.ndim == 2 and x.shape[1] != 1:
        raise ValueError(
            f"The input tensor is expected to be of shape (batch_size,) or "
            f"(batch_size, 1), got {x.shape}")
    if x.ndim == 1:
        x = x[:, None]

    b = x.shape[0]
    d = dim_embedding + int(dim_embedding % 2 == 1)
    # Lane-dense stores: pad D to a multiple of 128 only if needed.  When D is
    # already a 128-multiple (common real embedding dims) there is no padding
    # and no post-kernel copy at all.
    d_pad = d if (d % 128 == 0) else _round_up(max(d, 128), 128)
    # TODO(synk): for d < 128 a (B, d) -> (B/k, k*d) lane-packing view would
    # avoid the 128/d x extra writeback entirely; not implemented (pad+slice).

    out_dtype = jnp.dtype(out_dtype)
    out_itemsize = out_dtype.itemsize
    row_align = 16 if out_itemsize < 4 else 8     # bf16 tiles pack (16,128)
    tb = _choose_tb(b, d_pad, out_itemsize, row_align)
    grid = (pl.cdiv(b, tb),)

    tab = jnp.asarray(_build_table(dim_embedding, int(max_period), d_pad))
    x_f32 = x.astype(jnp.float32)

    cost = pl.CostEstimate(
        flops=2 * b * d_pad,
        transcendentals=b * d_pad,
        bytes_accessed=b * 4 + 2 * d_pad * 4 + b * d_pad * out_itemsize,
    )

    out = pl.pallas_call(
        _pe_kernel,
        out_shape=jax.ShapeDtypeStruct((b, d_pad), out_dtype),
        grid=grid,
        in_specs=[
            pl.BlockSpec((tb, 1), lambda i: (i, 0)),       # x row tile
            pl.BlockSpec((2, d_pad), lambda i: (0, 0)),    # freq/bias (resident)
        ],
        out_specs=pl.BlockSpec((tb, d_pad), lambda i: (i, 0)),
        compiler_params=pltpu.CompilerParams(
            dimension_semantics=("parallel",)),
        cost_estimate=cost,
    )(x_f32, tab)

    if d_pad != d:
        out = out[:, :d]
    return out


def _reference(x, dim_embedding: int, max_period: int = 10000):
    """Pure-JAX reference matching the PyTorch forward (f32)."""
    if x.ndim == 1:
        x = x[:, None]
    d = dim_embedding + int(dim_embedding % 2 == 1)
    sin_pos = jnp.arange(0, d, 2, dtype=jnp.float32) / d
    cos_pos = jnp.arange(1, d, 2, dtype=jnp.float32) / d
    log_mp = jnp.float32(math.log(float(max_period)))
    sin_freq = jnp.exp(-log_mp * sin_pos)[None, :]
    cos_freq = jnp.exp(-log_mp * cos_pos)[None, :]
    x = x.astype(jnp.float32)
    pe = jnp.zeros((x.shape[0], d), jnp.float32)
    pe = pe.at[:, 0::2].set(jnp.sin(sin_freq * x))
    pe = pe.at[:, 1::2].set(jnp.cos(cos_freq * x))
    return pe


if __name__ == "__main__":
    key = jax.random.PRNGKey(0)

    # 1) Small shape consistent with the module: batch of scalar positions,
    #    odd dim_embedding (module pads 31 -> 32), f32 output.
    batch = 8
    dim_embedding = 31
    max_period = 10000
    x = jax.random.uniform(key, (batch,), dtype=jnp.float32) * 100.0

    out = jax.block_until_ready(positional_encoding(x, dim_embedding, max_period))
    ref = _reference(x, dim_embedding, max_period)
    assert out.shape == (batch, dim_embedding + 1), out.shape
    assert out.dtype == jnp.float32
    assert jnp.allclose(out, ref, atol=1e-5, rtol=1e-5)

    # 2) Non-multiple-of-tile batch + 128-multiple D: exercises the ragged
    #    last row block, the no-slice output path, and the >=2-grid-step
    #    (megacore) tiling policy.
    x2 = jax.random.uniform(jax.random.PRNGKey(1), (1037,), jnp.float32) * 50.0
    out2 = jax.block_until_ready(positional_encoding(x2, 128, max_period))
    ref2 = _reference(x2, 128, max_period)
    assert out2.shape == (1037, 128)
    assert jnp.allclose(out2, ref2, atol=1e-5, rtol=1e-5)

    # 3) bf16 output path (f32 compute, bf16 writeback).
    out3 = jax.block_until_ready(
        positional_encoding(x2, 128, max_period, out_dtype=jnp.bfloat16))
    assert out3.dtype == jnp.bfloat16
    assert jnp.allclose(out3.astype(jnp.float32), ref2, atol=1e-2, rtol=1e-2)

    print("KERNEL_OK")
</pallas_src>

<mosaic_0001>
module attributes {stable_mosaic.version = 11 : i64} {
  func.func @_pe_kernel(%arg0: i32, %arg1: memref<8x1xf32, #tpu.memory_space<vmem>>, %arg2: memref<2x128xf32, #tpu.memory_space<vmem>>, %arg3: memref<8x128xf32, #tpu.memory_space<vmem>>) attributes {dimension_semantics = [#tpu.dimension_semantics<parallel>], iteration_bounds = array<i64: 1>, scalar_prefetch = 0 : i64, scratch_operands = 0 : i64, tpu.core_type = #tpu.core_type<tc>, window_params = [{transform_indices = @transform_0, window_bounds = array<i64: 8, 1>}, {pipeline_mode = #tpu.pipeline_mode<synchronous>, transform_indices = @transform_1, window_bounds = array<i64: 2, 128>}, {transform_indices = @transform_2, window_bounds = array<i64: 8, 128>}]} {
    %c0 = arith.constant 0 : index
    %c0_0 = arith.constant 0 : index
    %0 = vector.load %arg2[%c0, %c0_0] : memref<2x128xf32, #tpu.memory_space<vmem>>, vector<1x128xf32>
    %c1 = arith.constant 1 : index
    %c0_1 = arith.constant 0 : index
    %1 = vector.load %arg2[%c1, %c0_1] : memref<2x128xf32, #tpu.memory_space<vmem>>, vector<1x128xf32>
    %c0_2 = arith.constant 0 : index
    %c0_3 = arith.constant 0 : index
    %2 = vector.load %arg1[%c0_2, %c0_3] : memref<8x1xf32, #tpu.memory_space<vmem>>, vector<8x1xf32>
    %3 = vector.broadcast %2 : vector<8x1xf32> to vector<8x128xf32>
    %4 = vector.broadcast %0 : vector<1x128xf32> to vector<8x128xf32>
    %5 = arith.mulf %3, %4 : vector<8x128xf32>
    %6 = vector.broadcast %1 : vector<1x128xf32> to vector<8x128xf32>
    %7 = arith.addf %5, %6 : vector<8x128xf32>
    %8 = math.sin %7 : vector<8x128xf32>
    %c0_4 = arith.constant 0 : index
    %c0_5 = arith.constant 0 : index
    %9 = vector.load %arg3[%c0_4, %c0_5] : memref<8x128xf32, #tpu.memory_space<vmem>>, vector<8x128xf32>
    tpu.vector_store %arg3[%c0_4, %c0_5], %8 {strides = array<i32>} : memref<8x128xf32, #tpu.memory_space<vmem>>, vector<8x128xf32>,
    return
  }
  func.func @transform_0(%arg0: i32) -> (i32, i32) {
    %c0_i32 = arith.constant 0 : i32
    %c0_i32_0 = arith.constant 0 : i32
    return %arg0, %c0_i32 : i32, i32
  }
  func.func @transform_1(%arg0: i32) -> (i32, i32) {
    %c0_i32 = arith.constant 0 : i32
    %c0_i32_0 = arith.constant 0 : i32
    %c0_i32_1 = arith.constant 0 : i32
    return %c0_i32, %c0_i32_0 : i32, i32
  }
  func.func @transform_2(%arg0: i32) -> (i32, i32) {
    %c0_i32 = arith.constant 0 : i32
    %c0_i32_0 = arith.constant 0 : i32
    return %arg0, %c0_i32 : i32, i32
  }
}

</mosaic_0001>

<llo_original>
// kernel: tpu_custom_call.1
$region0: #{tpu_custom_call.1}
  #allocation0 [shape = 'u32[]', space=smem, size = 0x4, offset = 0x4, fixed_abs, tag = 'smem constant byte address 0x4 - core index']
  #allocation1 [shape = 'u32[72,128]{1,0:T(1,128)}', space=vmem, size = 0x9000, scoped, tag = 'internal scratch']
  %s0 = inlined_call_operand.vmem [shape: f32[8,1], index: 0, kind: input, shape index: {}]
  %s1 = inlined_call_operand.vmem [shape: f32[2,128], index: 1, kind: input, shape index: {}]
  %s2 = inlined_call_operand.hbm [shape: f32[8,128], index: 2, kind: output, shape index: {}]
  %s3 = sld [smem:[#allocation0]]
  $region18: #{tpu_custom_call.1} parent=0
    _
  %s5 = ssub.s32 1, %s3
  %s6 = scalar_select 0, %s5, %s3
  $region1: #{tpu_custom_call.1} parent=0
    #allocation2 [shape = 'u8[4096]{0}', space=vmem, size = 0x1000, scoped, tag = 'output window, operand 0, single buffered']
    #allocation3 [shape = 's32[1]{0}', space=sflag, size = 0x4, scoped, tag = 'scoped memory for tpu_custom_call.1']
    %7 = vsyncpa [#allocation3], 0
    // Predicated region
    $region2: #{tpu_custom_call.1} parent=1 // pred_check
      _
    $region3: #{tpu_custom_call.1} parent=1 // pred_check_branch
      %9 = sbr.rel (0) target = $region5
    $region4: #{tpu_custom_call.1} parent=1 // pred_region
      _
    $region5: #{tpu_custom_call.1} parent=1 // pred_fallthru
      _
    // Predicated region
    $region6: #{tpu_custom_call.1} parent=1 // pred_check
      _
    $region7: #{tpu_custom_call.1} parent=1 // pred_check_branch
      %11 = sbr.rel (0) target = $region9
    $region8: #{tpu_custom_call.1} parent=1 // pred_region
      _
    $region9: #{tpu_custom_call.1} parent=1 // pred_fallthru
      _
    %v12 = vld [vmem:[%s1] sm:$0x1]
    %v13 = vld [vmem:[%s1 + $0x1] sm:$0x1]
    %v14 = vld [vmem:[%s0] sm:$0xff]
    %16 = vset.pattern.permute.xlu0 0
    %17 = vperm.xlu0 %16, %v14
    %v18 = vpop.permute.xlu0 %17
    %v20 = vperm.slane %v12, 0
    %v21 = vmul.f32 %v18, %v20
    %v22 = vperm.slane %v13, 0
    %v23 = vadd.f32 %v21, %v22
    %v24 = vand.u32 2147483647, %v23
    %vm25 = vcmp.le.f32.partialorder %v24, 0.7853982
    %vm26 = vcmp.lt.s32.totalorder %v23, 0
    %v27 = vand.u32 %v23, 2139095040
    %v28 = vshrl.u32 %v27, 23
    %v29 = vsub.s32 %v28, 127
    %v30 = vand.u32 2147483647, %v23
    %v31 = vand.u32 %v30, 8388607
    %v32 = vor.u32 %v31, 8388608
    %v33 = vsub.s32 0, %v32
    %v34 = vadd.s32 %v29, 1
    %vm35 = vcmp.gt.s32.totalorder %v34, 0
    %v36 = vsel %vm35, %v34, 0
    %v37 = vshrl.u32 %v36, 5
    %v38 = vand.u32 %v36, 31
    %v39 = vsub.s32 32, %v38
    %v40 = vshrl.u32 683565275, %v39
    %v41 = vshll.u32 683565275, %v38
    %v42 = vshrl.u32 2475754826, %v39
    %v43 = vor.u32 %v41, %v42
    %v44 = vshll.u32 2475754826, %v38
    %v45 = vshrl.u32 2131351028, %v39
    %v46 = vor.u32 %v44, %v45
    %v47 = vshll.u32 2131351028, %v38
    %v48 = vshrl.u32 2102212464, %v39
    %v49 = vor.u32 %v47, %v48
    %v50 = vshll.u32 2102212464, %v38
    %v51 = vshrl.u32 920167782, %v39
    %v52 = vor.u32 %v50, %v51
    %v53 = vshll.u32 920167782, %v38
    %v54 = vshrl.u32 1326507024, %v39
    %v55 = vor.u32 %v53, %v54
    %vm56 = vcmp.lt.s32.totalorder %v37, 1
    %vm57 = vcmp.lt.s32.totalorder %v37, 2
    %vm58 = vcmp.lt.s32.totalorder %v37, 3
    %vm59 = vcmp.lt.s32.totalorder %v37, 4
    %v60 = vsel %vm56, %v40, %v43
    %v61 = vsel %vm59, %v49, 2102212464
    %v62 = vsel %vm58, %v46, %v61
    %v63 = vsel %vm57, %v60, %v62
    %v64 = vsel %vm56, %v43, %v46
    %v65 = vsel %vm59, %v52, 920167782
    %v66 = vsel %vm58, %v49, %v65
    %v67 = vsel %vm57, %v64, %v66
    %v68 = vsel %vm56, %v46, %v49
    %v69 = vsel %vm59, %v55, 1326507024
    %v70 = vsel %vm58, %v52, %v69
    %v71 = vsel %vm57, %v68, %v70
    %v72 = vshll.u32 %v32, 8
    %v73 = vand.u32 %v72, 65535
    %v74 = vshrl.u32 %v72, 16
    %v75 = vand.u32 %v71, 65535
    %v76 = vshrl.u32 %v71, 16
    %v77 = vmul.u32 %v73, %v75
    %v78 = vmul.u32 %v73, %v76
    %v79 = vmul.u32 %v74, %v75
    %v80 = vmul.u32 %v74, %v76
    %v81 = vshll.u32 %v78, 16
    %v82 = vshrl.u32 %v78, 16
    %v83 = vshll.u32 %v79, 16
    %v84 = vshrl.u32 %v79, 16
    %vm85 = vc.u32 %v77, %v81
    %v86 = vsel %vm85, 1, 0
    %v87 = vadd.s32 %v77, %v81
    %v88 = vadd.s32 %v80, %v86
    %vm89 = vc.u32 %v87, %v83
    %v90 = vsel %vm89, 1, 0
    %v91 = vadd.s32 %v87, %v83
    %v92 = vadd.s32 %v88, %v90
    %v93 = vadd.s32 %v92, %v82
    %v94 = vadd.s32 %v93, %v84
    %v95 = vand.u32 %v72, 65535
    %v96 = vshrl.u32 %v72, 16
    %v97 = vand.u32 %v67, 65535
    %v98 = vshrl.u32 %v67, 16
    %v99 = vmul.u32 %v95, %v97
    %v100 = vmul.u32 %v95, %v98
    %v101 = vmul.u32 %v96, %v97
    %v102 = vmul.u32 %v96, %v98
    %v103 = vshll.u32 %v100, 16
    %v104 = vshrl.u32 %v100, 16
    %v105 = vshll.u32 %v101, 16
    %v106 = vshrl.u32 %v101, 16
    %vm107 = vc.u32 %v99, %v103
    %v108 = vsel %vm107, 1, 0
    %v109 = vadd.s32 %v99, %v103
    %v110 = vadd.s32 %v102, %v108
    %vm111 = vc.u32 %v109, %v105
    %v112 = vsel %vm111, 1, 0
    %v113 = vadd.s32 %v109, %v105
    %v114 = vadd.s32 %v110, %v112
    %v115 = vadd.s32 %v114, %v104
    %v116 = vadd.s32 %v115, %v106
    %v117 = vmul.u32 %v72, %v63
    %v118 = vadd.s32 %v94, %v113
    %vm119 = vc.u32 %v94, %v113
    %v120 = vadd.s32 %v116, 1
    %v121 = vsel %vm119, %v120, %v116
    %v122 = vadd.s32 %v117, %v121
    %v123 = vadd.s32 %v122, 536870912
    %v124 = vshrl.u32 %v123, 30
    %v125 = vshll.u32 %v124, 30
    %v126 = vsub.s32 %v122, %v125
    %vm127 = vcmp.lt.s32.totalorder %v126, 0
    %v128 = vsub.s32 0, %v126
    %v129 = vsel %vm127, %v128, %v126
    %v130 = vclz %v129
    %v131 = vsub.s32 %v130, 2
    %vm132 = vcmp.gt.s32.totalorder 0, %v131
    %v133 = vsel %vm132, 0, %v131
    %v134 = vsub.s32 32, %v133
    %v135 = vshll.u32 %v126, %v133
    %v136 = vshrl.u32 %v118, %v134
    %v137 = vor.u32 %v135, %v136
    %v138 = vsub.s32 4294967266, %v133
    %v139 = vadd.s32 %v138, 127
    %v140 = vshll.u32 %v139, 23
    %v141 = vor.u32 4788187, %v140
    %v142 = vand.u32 2147483647, %v141
    %v144 = vcvt.s32.f32 %v137
    %v145 = vmul.f32 %v144, %v142
    %v146 = vxor.u32 %v145, 2147483648
    %v147 = vsel %vm26, %v146, %v145
    %v148 = vsub.s32 4, %v124
    %v149 = vsel %vm26, %v148, %v124
    %v150 = vsel %vm25, %v23, %v147
    %v151 = vsel %vm25, 0, %v149
    %v152 = vmul.f32 %v150, %v150
    %v153 = vmul.f32 %v152, -0.001358992
    %v154 = vadd.f32 %v153, 0.041655596
    %v155 = vmul.f32 %v152, %v154
    %v156 = vadd.f32 %v155, -0.4999988
    %v157 = vmul.f32 %v152, %v156
    %v158 = vadd.f32 1.0, %v157
    %v159 = vmul.f32 %v150, %v150
    %v160 = vmul.f32 %v159, -0.00019511016
    %v161 = vadd.f32 %v160, 0.008332121
    %v162 = vmul.f32 %v159, %v161
    %v163 = vadd.f32 %v162, -0.16666654
    %v164 = vmul.f32 %v159, %v163
    %v165 = vadd.f32 %v164, 1.0
    %v166 = vmul.f32 %v165, %v150
    %vm167 = vweird.f32 %v23
    %v168 = vadd.s32 %v151, 3
    %v169 = vand.u32 %v168, 3
    %vm170 = vcmp.lt.s32.totalorder %v169, 2
    %vm171 = vcmp.eq.s32.totalorder %v169, 0
    %v172 = vxor.u32 %v166, 2147483648
    %v173 = vsel %vm171, %v158, %v172
    %vm174 = vcmp.eq.s32.totalorder %v169, 2
    %v175 = vxor.u32 %v158, 2147483648
    %v176 = vsel %vm174, %v175, %v166
    %v177 = vsel %vm170, %v173, %v176
    %v178 = vsel %vm167, nan, %v177
    %179 = vst [vmem:[#allocation2] sm:$0xff] %v178
    // Predicated region
    $region10: #{tpu_custom_call.1} parent=1 // pred_check
      _
    $region11: #{tpu_custom_call.1} parent=1 // pred_check_branch
      %181 = sbr.rel (0) target = $region13
    $region12: #{tpu_custom_call.1} parent=1 // pred_region
      %183 = vsyncadd [#allocation3], 0
      %s185 = sshll.u32 [#allocation2], 4
      %s186 = int_to_ptr.vmem [resolvable:$true] %s185
      %s187 = sshll.u32 %s2, 4
      %s188 = int_to_ptr.hbm [resolvable:$true] %s187
      %190 = dma.vmem_to_hbm [thread:$0]  %s186, 128, %s188, [#allocation3]
    $region13: #{tpu_custom_call.1} parent=1 // pred_fallthru
      _
    // Predicated region
    $region14: #{tpu_custom_call.1} parent=1 // pred_check
      _
    $region15: #{tpu_custom_call.1} parent=1 // pred_check_branch
      %192 = sbr.rel (0) target = $region17
    $region16: #{tpu_custom_call.1} parent=1 // pred_region
      %194 = dma.done [#allocation3], 128
    $region17: #{tpu_custom_call.1} parent=1 // pred_fallthru
      _
    %195 = vsyncpa [#allocation3], 1

</llo_original>
